<compile_context>
chip_gen: v5e
topology: v5e:2x2
jax: 0.10.0
libtpu: 0.0.40
codegen_flags: <defaults>
</compile_context>

<pallas_src>
import jax
import jax.numpy as jnp
from jax.experimental import pallas as pl
from jax.experimental.pallas import tpu as pltpu

# ---- cfg.dm.* constants (standard DiffusionDet-style defaults) ----------------
TIMESTEPS = 1000
SCALE = 2.0          # cfg.dm.scale
USE_SCALE = True     # cfg.dm.use_scale
NUM_QUERIES = 40     # num_queries


def linear_beta_schedule(timesteps, beta_start=1e-4, beta_end=2e-2):
    return jnp.linspace(beta_start, beta_end, timesteps, dtype=jnp.float32)


def make_schedule(timesteps=TIMESTEPS):
    betas = linear_beta_schedule(timesteps)
    alphas = 1.0 - betas
    alphas_bar = jnp.cumprod(alphas, axis=0)
    sqrt_alphas_bar = jnp.sqrt(alphas_bar)
    sqrt_one_minus_alphas_bar = jnp.sqrt(1.0 - alphas_bar)
    return sqrt_alphas_bar, sqrt_one_minus_alphas_bar


# ---- Pallas kernel -------------------------------------------------------------
def q_sample_kernel(a2_ref, bias_ref, om_ref, gt_ref, noise_ref, x_ref, nseg_ref):
    """Single invocation over the whole batch.

    a2_ref, bias_ref, om_ref : (B, 1)    f32 VMEM  per-batch fused coefficients
    gt_ref, noise_ref        : (B, Nq*2) f32 VMEM  lane-dense gt segments / noise
    x_ref, nseg_ref          : (B, Nq*2) f32 VMEM  outputs
    """
    x = a2_ref[...] * gt_ref[...] + om_ref[...] * noise_ref[...] + bias_ref[...]
    if USE_SCALE:
        x = jnp.clip(x, -SCALE, SCALE)
        nseg = x * (0.5 / SCALE) + 0.5
    else:
        nseg = x
    x_ref[...] = x
    nseg_ref[...] = nseg


def diffusion_forward_train(gt_seg, t, noise, sqrt_alphas_bar, sqrt_one_minus_alphas_bar):
    """Replicates DiffusionModel.forward (training branch) up to the denoiser call.

    Returns (x, noise_segments); `noise_segments` is what would be fed into
    self.denoise_model(samples, noise_segments, t).
    """
    B, Nq, C = gt_seg.shape

    # Timestep gather ("extract") in plain JAX -> per-batch scalar coefficients.
    a = sqrt_alphas_bar[t].astype(jnp.float32)                    # (B,)
    om = sqrt_one_minus_alphas_bar[t].astype(jnp.float32)         # (B,)
    if USE_SCALE:
        # (gt*2 - 1)*scale folded into the q_sample coefficients:
        #   a * ((gt*2-1)*scale) = (2*scale*a)*gt + (-scale*a)
        a2 = (2.0 * SCALE) * a
        bias = (-SCALE) * a
    else:
        a2 = a
        bias = jnp.zeros_like(a)
    a2 = a2[:, None]          # (B, 1)
    bias = bias[:, None]      # (B, 1)
    om = om[:, None]          # (B, 1)

    # Lane-dense layout: fold the tiny trailing dim (2) into the query axis.
    gt2 = gt_seg.reshape(B, Nq * C).astype(jnp.float32)
    noise2 = noise.reshape(B, Nq * C).astype(jnp.float32)

    vmem = pl.BlockSpec(memory_space=pltpu.MemorySpace.VMEM)
    x2, nseg2 = pl.pallas_call(
        q_sample_kernel,
        out_shape=(
            jax.ShapeDtypeStruct((B, Nq * C), jnp.float32),
            jax.ShapeDtypeStruct((B, Nq * C), jnp.float32),
        ),
        in_specs=[vmem, vmem, vmem, vmem, vmem],
        out_specs=(vmem, vmem),
    )(a2, bias, om, gt2, noise2)

    return x2.reshape(B, Nq, C), nseg2.reshape(B, Nq, C)


# ---- glue: pad_seg / get_seg_start equivalent (plain JAX, data prep) ------------
def pad_seg(seg, n, key):
    """seg: (num_action, 2) -> (n, 2), padded with randn/6 + 0.5, width clipped."""
    num = seg.shape[0]
    if num >= n:
        return seg[:n]
    rand_seg = jax.random.normal(key, (n - num, 2), dtype=jnp.float32) / 6.0 + 0.5
    rand_seg = rand_seg.at[:, 1].set(jnp.clip(rand_seg[:, 1], 1e-4, None))
    return jnp.concatenate([seg, rand_seg], axis=0)


if __name__ == "__main__":
    key = jax.random.PRNGKey(0)
    k_seg0, k_seg1, k_pad0, k_pad1, k_t, k_noise = jax.random.split(key, 6)

    B = 2
    Nq = NUM_QUERIES

    # Synthetic targets: two videos with 5 and 12 ground-truth segments each.
    seg_a = jnp.abs(jax.random.normal(k_seg0, (5, 2), dtype=jnp.float32)) * 0.2 + 0.1
    seg_b = jnp.abs(jax.random.normal(k_seg1, (12, 2), dtype=jnp.float32)) * 0.2 + 0.1
    gt_seg = jnp.stack([pad_seg(seg_a, Nq, k_pad0), pad_seg(seg_b, Nq, k_pad1)])  # (B, Nq, 2)

    t = jax.random.randint(k_t, (B,), 0, TIMESTEPS, dtype=jnp.int32)
    noise = jax.random.normal(k_noise, (B, Nq, 2), dtype=jnp.float32)

    sqrt_alphas_bar, sqrt_one_minus_alphas_bar = make_schedule()

    x, noise_segments = diffusion_forward_train(
        gt_seg, t, noise, sqrt_alphas_bar, sqrt_one_minus_alphas_bar
    )
    jax.block_until_ready((x, noise_segments))

    # Pure-JAX reference check of the same math.
    gt_s = (gt_seg * 2.0 - 1.0) * SCALE
    a_ref = sqrt_alphas_bar[t][:, None, None]
    om_ref = sqrt_one_minus_alphas_bar[t][:, None, None]
    x_ref = jnp.clip(a_ref * gt_s + om_ref * noise, -SCALE, SCALE)
    nseg_ref = (x_ref / SCALE + 1.0) / 2.0
    assert jnp.allclose(x, x_ref, atol=1e-5, rtol=1e-5)
    assert jnp.allclose(noise_segments, nseg_ref, atol=1e-5, rtol=1e-5)

    print("KERNEL_OK")
</pallas_src>

<mosaic_0001>
module attributes {stable_mosaic.version = 11 : i64} {
  func.func @q_sample_kernel(%arg0: memref<2x1xf32, #tpu.memory_space<vmem>>, %arg1: memref<2x1xf32, #tpu.memory_space<vmem>>, %arg2: memref<2x1xf32, #tpu.memory_space<vmem>>, %arg3: memref<2x80xf32, #tpu.memory_space<vmem>>, %arg4: memref<2x80xf32, #tpu.memory_space<vmem>>, %arg5: memref<2x80xf32, #tpu.memory_space<vmem>>, %arg6: memref<2x80xf32, #tpu.memory_space<vmem>>) attributes {dimension_semantics = [], scalar_prefetch = 0 : i64, scratch_operands = 0 : i64, tpu.core_type = #tpu.core_type<tc>} {
    %c0 = arith.constant 0 : index
    %c0_0 = arith.constant 0 : index
    %0 = vector.load %arg0[%c0, %c0_0] : memref<2x1xf32, #tpu.memory_space<vmem>>, vector<2x1xf32>
    %c0_1 = arith.constant 0 : index
    %c0_2 = arith.constant 0 : index
    %1 = vector.load %arg3[%c0_1, %c0_2] : memref<2x80xf32, #tpu.memory_space<vmem>>, vector<2x80xf32>
    %2 = vector.broadcast %0 : vector<2x1xf32> to vector<2x80xf32>
    %3 = arith.mulf %2, %1 : vector<2x80xf32>
    %c0_3 = arith.constant 0 : index
    %c0_4 = arith.constant 0 : index
    %4 = vector.load %arg2[%c0_3, %c0_4] : memref<2x1xf32, #tpu.memory_space<vmem>>, vector<2x1xf32>
    %c0_5 = arith.constant 0 : index
    %c0_6 = arith.constant 0 : index
    %5 = vector.load %arg4[%c0_5, %c0_6] : memref<2x80xf32, #tpu.memory_space<vmem>>, vector<2x80xf32>
    %6 = vector.broadcast %4 : vector<2x1xf32> to vector<2x80xf32>
    %7 = arith.mulf %6, %5 : vector<2x80xf32>
    %8 = arith.addf %3, %7 : vector<2x80xf32>
    %c0_7 = arith.constant 0 : index
    %c0_8 = arith.constant 0 : index
    %9 = vector.load %arg1[%c0_7, %c0_8] : memref<2x1xf32, #tpu.memory_space<vmem>>, vector<2x1xf32>
    %10 = vector.broadcast %9 : vector<2x1xf32> to vector<2x80xf32>
    %11 = arith.addf %8, %10 : vector<2x80xf32>
    %cst = arith.constant -2.000000e+00 : f32
    %cst_9 = arith.constant 2.000000e+00 : f32
    %12 = vector.broadcast %cst : f32 to vector<2x80xf32>
    %13 = arith.maximumf %12, %11 : vector<2x80xf32>
    %14 = vector.broadcast %cst_9 : f32 to vector<2x80xf32>
    %15 = arith.minimumf %14, %13 : vector<2x80xf32>
    %cst_10 = arith.constant 2.500000e-01 : f32
    %16 = vector.broadcast %cst_10 : f32 to vector<2x80xf32>
    %17 = arith.mulf %15, %16 : vector<2x80xf32>
    %cst_11 = arith.constant 5.000000e-01 : f32
    %18 = vector.broadcast %cst_11 : f32 to vector<2x80xf32>
    %19 = arith.addf %17, %18 : vector<2x80xf32>
    %c0_12 = arith.constant 0 : index
    %c0_13 = arith.constant 0 : index
    %20 = vector.load %arg5[%c0_12, %c0_13] : memref<2x80xf32, #tpu.memory_space<vmem>>, vector<2x80xf32>
    tpu.vector_store %arg5[%c0_12, %c0_13], %15 {strides = array<i32>} : memref<2x80xf32, #tpu.memory_space<vmem>>, vector<2x80xf32>,
    %c0_14 = arith.constant 0 : index
    %c0_15 = arith.constant 0 : index
    %21 = vector.load %arg6[%c0_14, %c0_15] : memref<2x80xf32, #tpu.memory_space<vmem>>, vector<2x80xf32>
    tpu.vector_store %arg6[%c0_14, %c0_15], %19 {strides = array<i32>} : memref<2x80xf32, #tpu.memory_space<vmem>>, vector<2x80xf32>,
    return
  }
}

</mosaic_0001>

<llo_original>
// kernel: tpu_custom_call.1
$region0: #{tpu_custom_call.1}
  #allocation0 [shape = 'u32[]', space=smem, size = 0x4, offset = 0x4, fixed_abs, tag = 'smem constant byte address 0x4 - core index']
  #allocation1 [shape = 'u32[72,128]{1,0:T(1,128)}', space=vmem, size = 0x9000, scoped, tag = 'internal scratch']
  %s0 = inlined_call_operand.vmem [shape: f32[2,1], index: 0, kind: input, shape index: {}]
  %s1 = inlined_call_operand.vmem [shape: f32[2,1], index: 1, kind: input, shape index: {}]
  %s2 = inlined_call_operand.vmem [shape: f32[2,1], index: 2, kind: input, shape index: {}]
  %s3 = inlined_call_operand.vmem [shape: f32[2,80], index: 3, kind: input, shape index: {}]
  %s4 = inlined_call_operand.vmem [shape: f32[2,80], index: 4, kind: input, shape index: {}]
  %s5 = inlined_call_operand.hbm [shape: f32[2,80], index: 5, kind: output, shape index: {0}]
  %s6 = inlined_call_operand.hbm [shape: f32[2,80], index: 6, kind: output, shape index: {1}]
  %7 = xla_tuple %s5, %s6
  %s8 = sld [smem:[#allocation0]]
  $region38: #{tpu_custom_call.1} parent=0
    _
  %s10 = ssub.s32 1, %s8
  %s11 = scalar_select 0, %s10, %s8
  $region1: #{tpu_custom_call.1} parent=0
    #allocation2 [shape = 'u8[1024]{0}', space=vmem, size = 0x400, scoped, tag = 'output window, operand 0, single buffered']
    #allocation3 [shape = 's32[1]{0}', space=sflag, size = 0x4, scoped, tag = 'scoped memory for tpu_custom_call.1']
    #allocation4 [shape = 'u8[1024]{0}', space=vmem, size = 0x400, scoped, tag = 'output window, operand 1, single buffered']
    #allocation5 [shape = 's32[1]{0}', space=sflag, size = 0x4, scoped, tag = 'scoped memory for tpu_custom_call.1']
    %12 = vsyncpa [#allocation3], 0
    %13 = vsyncpa [#allocation5], 0
    // Predicated region
    $region2: #{tpu_custom_call.1} parent=1 // pred_check
      _
    $region3: #{tpu_custom_call.1} parent=1 // pred_check_branch
      %15 = sbr.rel (0) target = $region5
    $region4: #{tpu_custom_call.1} parent=1 // pred_region
      _
    $region5: #{tpu_custom_call.1} parent=1 // pred_fallthru
      _
    // Predicated region
    $region6: #{tpu_custom_call.1} parent=1 // pred_check
      _
    $region7: #{tpu_custom_call.1} parent=1 // pred_check_branch
      %17 = sbr.rel (0) target = $region9
    $region8: #{tpu_custom_call.1} parent=1 // pred_region
      _
    $region9: #{tpu_custom_call.1} parent=1 // pred_fallthru
      _
    // Predicated region
    $region10: #{tpu_custom_call.1} parent=1 // pred_check
      _
    $region11: #{tpu_custom_call.1} parent=1 // pred_check_branch
      %19 = sbr.rel (0) target = $region13
    $region12: #{tpu_custom_call.1} parent=1 // pred_region
      _
    $region13: #{tpu_custom_call.1} parent=1 // pred_fallthru
      _
    // Predicated region
    $region14: #{tpu_custom_call.1} parent=1 // pred_check
      _
    $region15: #{tpu_custom_call.1} parent=1 // pred_check_branch
      %21 = sbr.rel (0) target = $region17
    $region16: #{tpu_custom_call.1} parent=1 // pred_region
      _
    $region17: #{tpu_custom_call.1} parent=1 // pred_fallthru
      _
    // Predicated region
    $region18: #{tpu_custom_call.1} parent=1 // pred_check
      _
    $region19: #{tpu_custom_call.1} parent=1 // pred_check_branch
      %23 = sbr.rel (0) target = $region21
    $region20: #{tpu_custom_call.1} parent=1 // pred_region
      _
    $region21: #{tpu_custom_call.1} parent=1 // pred_fallthru
      _
    %v24 = vld [vmem:[%s0] sm:$0x3]
    %v25 = vld [vmem:[%s3] sm:$0x3]
    %27 = vset.pattern.permute.xlu0 0
    %28 = vperm.xlu0 %27, %v24
    %v29 = vpop.permute.xlu0 %28
    %v31 = vmul.f32 %v29, %v25
    %v32 = vld [vmem:[%s2] sm:$0x3]
    %v33 = vld [vmem:[%s4] sm:$0x3]
    %35 = vset.pattern.permute.xlu0 0
    %36 = vperm.xlu0 %35, %v32
    %v37 = vpop.permute.xlu0 %36
    %v39 = vmul.f32 %v37, %v33
    %v40 = vadd.f32 %v31, %v39
    %v41 = vld [vmem:[%s1] sm:$0x3]
    %43 = vset.pattern.permute.xlu0 0
    %44 = vperm.xlu0 %43, %v41
    %v45 = vpop.permute.xlu0 %44
    %v47 = vadd.f32 %v40, %v45
    %v48 = vmax.f32 %v47, -2.0
    %v49 = vmin.f32 %v48, 2.0
    %v50 = vmul.f32 %v49, 0.25
    %v51 = vadd.f32 %v50, 0.5
    %vm52 = vcmask 648192
    %53 = vst.msk [vmem:[#allocation2] sm:$0x3] %vm52, %v49
    %54 = vst.msk [vmem:[#allocation4] sm:$0x3] %vm52, %v51
    // Predicated region
    $region22: #{tpu_custom_call.1} parent=1 // pred_check
      _
    $region23: #{tpu_custom_call.1} parent=1 // pred_check_branch
      %56 = sbr.rel (0) target = $region25
    $region24: #{tpu_custom_call.1} parent=1 // pred_region
      %58 = vsyncadd [#allocation3], 0
      %s60 = sshll.u32 [#allocation2], 4
      %s61 = int_to_ptr.vmem [resolvable:$true] %s60
      %s62 = sshll.u32 %s5, 4
      %s63 = int_to_ptr.hbm [resolvable:$true] %s62
      %65 = dma.vmem_to_hbm [thread:$0]  %s61, 32, %s63, [#allocation3]
    $region25: #{tpu_custom_call.1} parent=1 // pred_fallthru
      _
    // Predicated region
    $region26: #{tpu_custom_call.1} parent=1 // pred_check
      _
    $region27: #{tpu_custom_call.1} parent=1 // pred_check_branch
      %67 = sbr.rel (0) target = $region29
    $region28: #{tpu_custom_call.1} parent=1 // pred_region
      %69 = vsyncadd [#allocation5], 0
      %s71 = sshll.u32 [#allocation4], 4
      %s72 = int_to_ptr.vmem [resolvable:$true] %s71
      %s73 = sshll.u32 %s6, 4
      %s74 = int_to_ptr.hbm [resolvable:$true] %s73
      %76 = dma.vmem_to_hbm [thread:$0]  %s72, 32, %s74, [#allocation5]
    $region29: #{tpu_custom_call.1} parent=1 // pred_fallthru
      _
    // Predicated region
    $region30: #{tpu_custom_call.1} parent=1 // pred_check
      _
    $region31: #{tpu_custom_call.1} parent=1 // pred_check_branch
      %78 = sbr.rel (0) target = $region33
    $region32: #{tpu_custom_call.1} parent=1 // pred_region
      %80 = dma.done [#allocation3], 32
    $region33: #{tpu_custom_call.1} parent=1 // pred_fallthru
      _
    // Predicated region
    $region34: #{tpu_custom_call.1} parent=1 // pred_check
      _
    $region35: #{tpu_custom_call.1} parent=1 // pred_check_branch
      %82 = sbr.rel (0) target = $region37
    $region36: #{tpu_custom_call.1} parent=1 // pred_region
      %84 = dma.done [#allocation5], 32
    $region37: #{tpu_custom_call.1} parent=1 // pred_fallthru
      _
    %85 = vsyncpa [#allocation3], 1
    %86 = vsyncpa [#allocation5], 1

</llo_original>
